<compile_context>
chip_gen: v7x
topology: tpu7x:2x2x1
jax: 0.10.0
libtpu: 0.0.40
codegen_flags: <defaults>
</compile_context>

<pallas_src>
import jax
import jax.numpy as jnp
from jax.experimental import pallas as pl
from jax.experimental.pallas import tpu as pltpu

LANE = 128

# Flipped to False at runtime if pl.Buffered(1) single-buffering of the
# resident weights is rejected by the installed JAX / Mosaic version.
_SINGLE_BUFFER_WEIGHTS = hasattr(pl, "Buffered")


def _round_up(x, m):
    return ((x + m - 1) // m) * m


def dqn_kernel(x_ref, w1_ref, b1_ref, w2_ref, b2_ref, w3_ref, b3_ref, o_ref):
    x = x_ref[...]            # (TB, S)   f32
    w1 = w1_ref[...]          # (S, H)    f32
    S = x.shape[1]

    # ---- fc1 ----
    if S <= 8:
        # VPU path: K is tiny; an MXU contraction would pad K to a full tile
        # (mostly wasted work) and add push/pop latency.  S broadcast-FMAs on
        # (TB, H) tiles run in VALU/XLU slots while fc2/fc3 own the MXU.
        # (Threshold kept tight: each x[:, k:k+1] lane-slice+broadcast is a
        #  cross-lane op, so larger S should use the MXU instead.)
        acc = x[:, 0:1] * w1[0:1, :]
        for k in range(1, S):
            acc = acc + x[:, k:k + 1] * w1[k:k + 1, :]
    else:
        acc = jnp.dot(x, w1, preferred_element_type=jnp.float32)
    h1 = jnp.maximum(acc + b1_ref[...], 0.0)          # f32 epilogue

    # ---- fc2 (MXU: bf16 x bf16 -> f32 accumulate; epilogue in f32) ----
    w2 = w2_ref[...]
    h2 = jnp.dot(h1.astype(w2.dtype), w2, preferred_element_type=jnp.float32)
    h2 = jnp.maximum(h2 + b2_ref[...], 0.0)

    # ---- fc3 (MXU; output pre-padded to lane-dense 128) ----
    w3 = w3_ref[...]
    out = jnp.dot(h2.astype(w3.dtype), w3, preferred_element_type=jnp.float32)
    o_ref[...] = (out + b3_ref[...]).astype(o_ref.dtype)


def _run(x, w1, b1, w2, b2, w3p, b3p, *, tb, n_tiles, single_buffer):
    """Build and invoke the pallas_call for a padded batch."""
    B_pad, S = x.shape
    A_pad = w3p.shape[1]

    def resident(a):
        # Constant index_map -> DMA'd once, VMEM-resident across batch tiles.
        if single_buffer:
            return pl.BlockSpec(a.shape, lambda i: (0, 0),
                                pipeline_mode=pl.Buffered(1))
        return pl.BlockSpec(a.shape, lambda i: (0, 0))

    return pl.pallas_call(
        dqn_kernel,
        out_shape=jax.ShapeDtypeStruct((B_pad, A_pad), jnp.float32),
        grid=(n_tiles,),
        in_specs=[
            pl.BlockSpec((tb, S), lambda i: (i, 0)),   # x: streamed row tiles
            resident(w1), resident(b1),
            resident(w2), resident(b2),
            resident(w3p), resident(b3p),
        ],
        out_specs=pl.BlockSpec((tb, A_pad), lambda i: (i, 0)),
        compiler_params=pltpu.CompilerParams(
            # Independent batch tiles -> megacore sharding on v7x; no-op elsewhere.
            dimension_semantics=("parallel",),
            # True footprint: ~100 KB weights + double-buffered (tb,128) tiles.
            vmem_limit_bytes=8 << 20,
        ),
    )(x, w1, b1, w2, b2, w3p, b3p)


def dqn_forward(x, params, *, block_b=512):
    """x: (B, state_dim) f32.  params: dict from init_dqn_params."""
    global _SINGLE_BUFFER_WEIGHTS

    w1, b1 = params["w1"], params["b1"]
    w2, b2 = params["w2"], params["b2"]
    w3p, b3p = params["w3p"], params["b3p"]
    A = params["action_dim"]

    B, S = x.shape
    if B == 0:
        return jnp.zeros((0, A), jnp.float32)

    # Adaptive batch tiling: minimize padding (<8 rows/tile) and force >= 2
    # balanced tiles for mid/large batches so v7x's two TCs both get work.
    n_tiles = pl.cdiv(B, block_b)
    if B > 16:
        n_tiles = max(n_tiles, 2)
    tb = _round_up(pl.cdiv(B, n_tiles), 8)      # multiple of 8 (f32 sublanes)
    B_pad = n_tiles * tb
    if B_pad != B:
        x = jnp.pad(x, ((0, B_pad - B), (0, 0)))

    if _SINGLE_BUFFER_WEIGHTS:
        try:
            out = _run(x, w1, b1, w2, b2, w3p, b3p,
                       tb=tb, n_tiles=n_tiles, single_buffer=True)
        except Exception:
            # Older JAX without BlockSpec pipeline_mode / Buffered(1) support.
            _SINGLE_BUFFER_WEIGHTS = False
            out = _run(x, w1, b1, w2, b2, w3p, b3p,
                       tb=tb, n_tiles=n_tiles, single_buffer=False)
    else:
        out = _run(x, w1, b1, w2, b2, w3p, b3p,
                   tb=tb, n_tiles=n_tiles, single_buffer=False)

    return out[:B, :A]


def init_dqn_params(key, state_dim, action_dim, hidden=128,
                    matmul_dtype=jnp.bfloat16):
    """PyTorch nn.Linear-style init (U[-1/sqrt(fan_in), 1/sqrt(fan_in)]).
    Weights stored transposed (in_features, out_features); w3/b3 pre-padded to
    a lane-dense 128-wide output and the MXU weights (fc2/fc3) pre-cast to
    `matmul_dtype` ONCE here, so the forward wrapper does no per-call fills."""
    def linear(k, fan_in, fan_out):
        kw, kb = jax.random.split(k)
        bound = 1.0 / jnp.sqrt(fan_in)
        w = jax.random.uniform(kw, (fan_in, fan_out), jnp.float32, -bound, bound)
        b = jax.random.uniform(kb, (1, fan_out), jnp.float32, -bound, bound)
        return w, b

    k1, k2, k3 = jax.random.split(key, 3)
    w1, b1 = linear(k1, state_dim, hidden)
    w2, b2 = linear(k2, hidden, hidden)
    w3, b3 = linear(k3, hidden, action_dim)

    a_pad = _round_up(action_dim, LANE)
    w3p = jnp.zeros((hidden, a_pad), jnp.float32).at[:, :action_dim].set(w3)
    b3p = jnp.zeros((1, a_pad), jnp.float32).at[:, :action_dim].set(b3)

    return {
        "w1": w1, "b1": b1,                          # fc1 stays f32 (VPU path)
        "w2": w2.astype(matmul_dtype), "b2": b2,     # bias/epilogue stay f32
        "w3p": w3p.astype(matmul_dtype), "b3p": b3p,
        "action_dim": action_dim,
    }


def dqn_reference(x, p):
    """Pure-JAX reference using the params' stored (possibly bf16) weights."""
    w2 = p["w2"].astype(jnp.float32)
    w3 = p["w3p"].astype(jnp.float32)
    h1 = jnp.maximum(x @ p["w1"] + p["b1"], 0.0)
    h2 = jnp.maximum(h1 @ w2 + p["b2"], 0.0)
    q = h2 @ w3 + p["b3p"]
    return q[:, :p["action_dim"]]


if __name__ == "__main__":
    key = jax.random.PRNGKey(0)
    k_param, k_x1, k_x2 = jax.random.split(key, 3)

    state_dim, action_dim = 4, 2  # CartPole-sized DQN

    # ---- f32 config: tight numerical check of the kernel itself ----
    params_f32 = init_dqn_params(k_param, state_dim, action_dim, hidden=128,
                                 matmul_dtype=jnp.float32)

    # Tiny action-selection call (single padded tile, grid=(1,)).
    x_small = jax.random.normal(k_x1, (2, state_dim), jnp.float32)
    out_small = jax.block_until_ready(dqn_forward(x_small, params_f32))
    assert out_small.shape == (2, action_dim)
    assert jnp.allclose(out_small, dqn_reference(x_small, params_f32),
                        atol=1e-5, rtol=1e-5)

    # Replay-batch call: B=300 -> n_tiles=2, tb=152, only 4 padded rows.
    x_big = jax.random.normal(k_x2, (300, state_dim), jnp.float32)
    out_big_f32 = jax.block_until_ready(dqn_forward(x_big, params_f32))
    assert out_big_f32.shape == (300, action_dim)
    assert jnp.allclose(out_big_f32, dqn_reference(x_big, params_f32),
                        atol=1e-4, rtol=1e-4)

    # ---- default mixed-precision (bf16 MXU weights) config ----
    params = init_dqn_params(k_param, state_dim, action_dim, hidden=128)
    out_big = jax.block_until_ready(dqn_forward(x_big, params))
    assert out_big.shape == (300, action_dim)
    # vs. a reference using the same (bf16-rounded) weights:
    assert jnp.allclose(out_big, dqn_reference(x_big, params),
                        atol=1e-2, rtol=1e-2)
    # sanity vs. full-f32 math (bf16 activation rounding error budget):
    assert jnp.allclose(out_big, dqn_reference(x_big, params_f32),
                        atol=5e-2, rtol=5e-2)

    print("KERNEL_OK")
</pallas_src>

<mosaic_0001>
module attributes {stable_mosaic.version = 11 : i64} {
  func.func @dqn_kernel(%arg0: i32, %arg1: memref<8x4xf32, #tpu.memory_space<vmem>>, %arg2: memref<4x128xf32, #tpu.memory_space<vmem>>, %arg3: memref<1x128xf32, #tpu.memory_space<vmem>>, %arg4: memref<128x128xf32, #tpu.memory_space<vmem>>, %arg5: memref<1x128xf32, #tpu.memory_space<vmem>>, %arg6: memref<128x128xf32, #tpu.memory_space<vmem>>, %arg7: memref<1x128xf32, #tpu.memory_space<vmem>>, %arg8: memref<8x128xf32, #tpu.memory_space<vmem>>) attributes {dimension_semantics = [#tpu.dimension_semantics<parallel>], iteration_bounds = array<i64: 1>, scalar_prefetch = 0 : i64, scratch_operands = 0 : i64, tpu.core_type = #tpu.core_type<tc>, window_params = [{transform_indices = @transform_0, window_bounds = array<i64: 8, 4>}, {pipeline_mode = #tpu.pipeline_mode<synchronous>, transform_indices = @transform_1, window_bounds = array<i64: 4, 128>}, {pipeline_mode = #tpu.pipeline_mode<synchronous>, transform_indices = @transform_2, window_bounds = array<i64: 1, 128>}, {pipeline_mode = #tpu.pipeline_mode<synchronous>, transform_indices = @transform_3, window_bounds = array<i64: 128, 128>}, {pipeline_mode = #tpu.pipeline_mode<synchronous>, transform_indices = @transform_4, window_bounds = array<i64: 1, 128>}, {pipeline_mode = #tpu.pipeline_mode<synchronous>, transform_indices = @transform_5, window_bounds = array<i64: 128, 128>}, {pipeline_mode = #tpu.pipeline_mode<synchronous>, transform_indices = @transform_6, window_bounds = array<i64: 1, 128>}, {transform_indices = @transform_7, window_bounds = array<i64: 8, 128>}]} {
    %c0 = arith.constant 0 : index
    %c0_0 = arith.constant 0 : index
    %0 = vector.load %arg1[%c0, %c0_0] : memref<8x4xf32, #tpu.memory_space<vmem>>, vector<8x4xf32>
    %c0_1 = arith.constant 0 : index
    %c0_2 = arith.constant 0 : index
    %1 = vector.load %arg2[%c0_1, %c0_2] : memref<4x128xf32, #tpu.memory_space<vmem>>, vector<4x128xf32>
    %2 = vector.extract_strided_slice %0 {offsets = [0, 0], sizes = [8, 1], strides = [1, 1]} : vector<8x4xf32> to vector<8x1xf32>
    %3 = vector.extract_strided_slice %1 {offsets = [0, 0], sizes = [1, 128], strides = [1, 1]} : vector<4x128xf32> to vector<1x128xf32>
    %4 = vector.broadcast %2 : vector<8x1xf32> to vector<8x128xf32>
    %5 = vector.broadcast %3 : vector<1x128xf32> to vector<8x128xf32>
    %6 = arith.mulf %4, %5 : vector<8x128xf32>
    %7 = vector.extract_strided_slice %0 {offsets = [0, 1], sizes = [8, 1], strides = [1, 1]} : vector<8x4xf32> to vector<8x1xf32>
    %8 = vector.extract_strided_slice %1 {offsets = [1, 0], sizes = [1, 128], strides = [1, 1]} : vector<4x128xf32> to vector<1x128xf32>
    %9 = vector.broadcast %7 : vector<8x1xf32> to vector<8x128xf32>
    %10 = vector.broadcast %8 : vector<1x128xf32> to vector<8x128xf32>
    %11 = arith.mulf %9, %10 : vector<8x128xf32>
    %12 = arith.addf %6, %11 : vector<8x128xf32>
    %13 = vector.extract_strided_slice %0 {offsets = [0, 2], sizes = [8, 1], strides = [1, 1]} : vector<8x4xf32> to vector<8x1xf32>
    %14 = vector.extract_strided_slice %1 {offsets = [2, 0], sizes = [1, 128], strides = [1, 1]} : vector<4x128xf32> to vector<1x128xf32>
    %15 = vector.broadcast %13 : vector<8x1xf32> to vector<8x128xf32>
    %16 = vector.broadcast %14 : vector<1x128xf32> to vector<8x128xf32>
    %17 = arith.mulf %15, %16 : vector<8x128xf32>
    %18 = arith.addf %12, %17 : vector<8x128xf32>
    %19 = vector.extract_strided_slice %0 {offsets = [0, 3], sizes = [8, 1], strides = [1, 1]} : vector<8x4xf32> to vector<8x1xf32>
    %20 = vector.extract_strided_slice %1 {offsets = [3, 0], sizes = [1, 128], strides = [1, 1]} : vector<4x128xf32> to vector<1x128xf32>
    %21 = vector.broadcast %19 : vector<8x1xf32> to vector<8x128xf32>
    %22 = vector.broadcast %20 : vector<1x128xf32> to vector<8x128xf32>
    %23 = arith.mulf %21, %22 : vector<8x128xf32>
    %24 = arith.addf %18, %23 : vector<8x128xf32>
    %c0_3 = arith.constant 0 : index
    %c0_4 = arith.constant 0 : index
    %25 = vector.load %arg3[%c0_3, %c0_4] : memref<1x128xf32, #tpu.memory_space<vmem>>, vector<1x128xf32>
    %26 = vector.broadcast %25 : vector<1x128xf32> to vector<8x128xf32>
    %27 = arith.addf %24, %26 : vector<8x128xf32>
    %cst = arith.constant 0.000000e+00 : f32
    %28 = vector.broadcast %cst : f32 to vector<8x128xf32>
    %29 = arith.maximumf %27, %28 : vector<8x128xf32>
    %c0_5 = arith.constant 0 : index
    %c0_6 = arith.constant 0 : index
    %30 = vector.load %arg4[%c0_5, %c0_6] : memref<128x128xf32, #tpu.memory_space<vmem>>, vector<128x128xf32>
    %cst_7 = arith.constant dense<0.000000e+00> : vector<8x128xf32>
    %31 = tpu.matmul %29, %30, %cst_7 {dimension_numbers = #tpu.dot_dimension_numbers<[1], [0], [0], [1], [0, 0, 1, 1], [], []>} : vector<8x128xf32>, vector<128x128xf32>, vector<8x128xf32> -> vector<8x128xf32>
    %c0_8 = arith.constant 0 : index
    %c0_9 = arith.constant 0 : index
    %32 = vector.load %arg5[%c0_8, %c0_9] : memref<1x128xf32, #tpu.memory_space<vmem>>, vector<1x128xf32>
    %33 = vector.broadcast %32 : vector<1x128xf32> to vector<8x128xf32>
    %34 = arith.addf %31, %33 : vector<8x128xf32>
    %cst_10 = arith.constant 0.000000e+00 : f32
    %35 = vector.broadcast %cst_10 : f32 to vector<8x128xf32>
    %36 = arith.maximumf %34, %35 : vector<8x128xf32>
    %c0_11 = arith.constant 0 : index
    %c0_12 = arith.constant 0 : index
    %37 = vector.load %arg6[%c0_11, %c0_12] : memref<128x128xf32, #tpu.memory_space<vmem>>, vector<128x128xf32>
    %cst_13 = arith.constant dense<0.000000e+00> : vector<8x128xf32>
    %38 = tpu.matmul %36, %37, %cst_13 {dimension_numbers = #tpu.dot_dimension_numbers<[1], [0], [0], [1], [0, 0, 1, 1], [], []>} : vector<8x128xf32>, vector<128x128xf32>, vector<8x128xf32> -> vector<8x128xf32>
    %c0_14 = arith.constant 0 : index
    %c0_15 = arith.constant 0 : index
    %39 = vector.load %arg7[%c0_14, %c0_15] : memref<1x128xf32, #tpu.memory_space<vmem>>, vector<1x128xf32>
    %40 = vector.broadcast %39 : vector<1x128xf32> to vector<8x128xf32>
    %41 = arith.addf %38, %40 : vector<8x128xf32>
    %c0_16 = arith.constant 0 : index
    %c0_17 = arith.constant 0 : index
    %42 = vector.load %arg8[%c0_16, %c0_17] : memref<8x128xf32, #tpu.memory_space<vmem>>, vector<8x128xf32>
    tpu.vector_store %arg8[%c0_16, %c0_17], %41 {strides = array<i32>} : memref<8x128xf32, #tpu.memory_space<vmem>>, vector<8x128xf32>,
    return
  }
  func.func @transform_0(%arg0: i32) -> (i32, i32) {
    %c0_i32 = arith.constant 0 : i32
    %c0_i32_0 = arith.constant 0 : i32
    return %arg0, %c0_i32 : i32, i32
  }
  func.func @transform_1(%arg0: i32) -> (i32, i32) {
    %c0_i32 = arith.constant 0 : i32
    %c0_i32_0 = arith.constant 0 : i32
    %c0_i32_1 = arith.constant 0 : i32
    return %c0_i32, %c0_i32_0 : i32, i32
  }
  func.func @transform_2(%arg0: i32) -> (i32, i32) {
    %c0_i32 = arith.constant 0 : i32
    %c0_i32_0 = arith.constant 0 : i32
    %c0_i32_1 = arith.constant 0 : i32
    return %c0_i32, %c0_i32_0 : i32, i32
  }
  func.func @transform_3(%arg0: i32) -> (i32, i32) {
    %c0_i32 = arith.constant 0 : i32
    %c0_i32_0 = arith.constant 0 : i32
    %c0_i32_1 = arith.constant 0 : i32
    return %c0_i32, %c0_i32_0 : i32, i32
  }
  func.func @transform_4(%arg0: i32) -> (i32, i32) {
    %c0_i32 = arith.constant 0 : i32
    %c0_i32_0 = arith.constant 0 : i32
    %c0_i32_1 = arith.constant 0 : i32
    return %c0_i32, %c0_i32_0 : i32, i32
  }
  func.func @transform_5(%arg0: i32) -> (i32, i32) {
    %c0_i32 = arith.constant 0 : i32
    %c0_i32_0 = arith.constant 0 : i32
    %c0_i32_1 = arith.constant 0 : i32
    return %c0_i32, %c0_i32_0 : i32, i32
  }
  func.func @transform_6(%arg0: i32) -> (i32, i32) {
    %c0_i32 = arith.constant 0 : i32
    %c0_i32_0 = arith.constant 0 : i32
    %c0_i32_1 = arith.constant 0 : i32
    return %c0_i32, %c0_i32_0 : i32, i32
  }
  func.func @transform_7(%arg0: i32) -> (i32, i32) {
    %c0_i32 = arith.constant 0 : i32
    %c0_i32_0 = arith.constant 0 : i32
    return %arg0, %c0_i32 : i32, i32
  }
}

module attributes {stable_mosaic.version = 11 : i64} {
  func.func @dqn_kernel(%arg0: i32, %arg1: memref<8x4xf32, #tpu.memory_space<vmem>>, %arg2: memref<4x128xf32, #tpu.memory_space<vmem>>, %arg3: memref<1x128xf32, #tpu.memory_space<vmem>>, %arg4: memref<128x128xf32, #tpu.memory_space<vmem>>, %arg5: memref<1x128xf32, #tpu.memory_space<vmem>>, %arg6: memref<128x128xf32, #tpu.memory_space<vmem>>, %arg7: memref<1x128xf32, #tpu.memory_space<vmem>>, %arg8: memref<8x128xf32, #tpu.memory_space<vmem>>) attributes {dimension_semantics = [#tpu.dimension_semantics<parallel>], iteration_bounds = array<i64: 1>, scalar_prefetch = 0 : i64, scratch_operands = 0 : i64, tpu.core_type = #tpu.core_type<tc>, window_params = [{transform_indices = @transform_0, window_bounds = array<i64: 8, 4>}, {pipeline_mode = #tpu.pipeline_mode<synchronous>, transform_indices = @transform_1, window_bounds = array<i64: 4, 128>}, {pipeline_mode = #tpu.pipeline_mode<synchronous>, transform_indices = @transform_2, window_bounds = array<i64: 1, 128>}, {pipeline_mode = #tpu.pipeline_mode<synchronous>, transform_indices = @transform_3, window_bounds = array<i64: 128, 128>}, {pipeline_mode = #tpu.pipeline_mode<synchronous>, transform_indices = @transform_4, window_bounds = array<i64: 1, 128>}, {pipeline_mode = #tpu.pipeline_mode<synchronous>, transform_indices = @transform_5, window_bounds = array<i64: 128, 128>}, {pipeline_mode = #tpu.pipeline_mode<synchronous>, transform_indices = @transform_6, window_bounds = array<i64: 1, 128>}, {transform_indices = @transform_7, window_bounds = array<i64: 8, 128>}]} {
    %c0 = arith.constant 0 : index
    %c0_0 = arith.constant 0 : index
    %0 = vector.load %arg1[%c0, %c0_0] : memref<8x4xf32, #tpu.memory_space<vmem>>, vector<8x4xf32>
    %c0_1 = arith.constant 0 : index
    %c0_2 = arith.constant 0 : index
    %1 = vector.load %arg2[%c0_1, %c0_2] : memref<4x128xf32, #tpu.memory_space<vmem>>, vector<4x128xf32>
    %2 = vector.extract_strided_slice %0 {offsets = [0, 0], sizes = [8, 1], strides = [1, 1]} : vector<8x4xf32> to vector<8x1xf32>
    %3 = vector.extract_strided_slice %1 {offsets = [0, 0], sizes = [1, 128], strides = [1, 1]} : vector<4x128xf32> to vector<1x128xf32>
    %4 = vector.broadcast %2 : vector<8x1xf32> to vector<8x128xf32>
    %5 = vector.broadcast %3 : vector<1x128xf32> to vector<8x128xf32>
    %6 = arith.mulf %4, %5 : vector<8x128xf32>
    %7 = vector.extract_strided_slice %0 {offsets = [0, 1], sizes = [8, 1], strides = [1, 1]} : vector<8x4xf32> to vector<8x1xf32>
    %8 = vector.extract_strided_slice %1 {offsets = [1, 0], sizes = [1, 128], strides = [1, 1]} : vector<4x128xf32> to vector<1x128xf32>
    %9 = vector.broadcast %7 : vector<8x1xf32> to vector<8x128xf32>
    %10 = vector.broadcast %8 : vector<1x128xf32> to vector<8x128xf32>
    %11 = arith.mulf %9, %10 : vector<8x128xf32>
    %12 = arith.addf %6, %11 : vector<8x128xf32>
    %13 = vector.extract_strided_slice %0 {offsets = [0, 2], sizes = [8, 1], strides = [1, 1]} : vector<8x4xf32> to vector<8x1xf32>
    %14 = vector.extract_strided_slice %1 {offsets = [2, 0], sizes = [1, 128], strides = [1, 1]} : vector<4x128xf32> to vector<1x128xf32>
    %15 = vector.broadcast %13 : vector<8x1xf32> to vector<8x128xf32>
    %16 = vector.broadcast %14 : vector<1x128xf32> to vector<8x128xf32>
    %17 = arith.mulf %15, %16 : vector<8x128xf32>
    %18 = arith.addf %12, %17 : vector<8x128xf32>
    %19 = vector.extract_strided_slice %0 {offsets = [0, 3], sizes = [8, 1], strides = [1, 1]} : vector<8x4xf32> to vector<8x1xf32>
    %20 = vector.extract_strided_slice %1 {offsets = [3, 0], sizes = [1, 128], strides = [1, 1]} : vector<4x128xf32> to vector<1x128xf32>
    %21 = vector.broadcast %19 : vector<8x1xf32> to vector<8x128xf32>
    %22 = vector.broadcast %20 : vector<1x128xf32> to vector<8x128xf32>
    %23 = arith.mulf %21, %22 : vector<8x128xf32>
    %24 = arith.addf %18, %23 : vector<8x128xf32>
    %c0_3 = arith.constant 0 : index
    %c0_4 = arith.constant 0 : index
    %25 = vector.load %arg3[%c0_3, %c0_4] : memref<1x128xf32, #tpu.memory_space<vmem>>, vector<1x128xf32>
    %26 = vector.broadcast %25 : vector<1x128xf32> to vector<8x128xf32>
    %27 = arith.addf %24, %26 : vector<8x128xf32>
    %cst = arith.constant 0.000000e+00 : f32
    %28 = vector.broadcast %cst : f32 to vector<8x128xf32>
    %29 = arith.maximumf %27, %28 : vector<8x128xf32>
    %c0_5 = arith.constant 0 : index
    %c0_6 = arith.constant 0 : index
    %30 = vector.load %arg4[%c0_5, %c0_6] : memref<128x128xf32, #tpu.memory_space<vmem>>, vector<128x128xf32>
    %cst_7 = arith.constant dense<0.000000e+00> : vector<8x128xf32>
    %31 = tpu.matmul %29, %30, %cst_7 {dimension_numbers = #tpu.dot_dimension_numbers<[1], [0], [0], [1], [0, 0, 1, 1], [], []>} : vector<8x128xf32>, vector<128x128xf32>, vector<8x128xf32> -> vector<8x128xf32>
    %c0_8 = arith.constant 0 : index
    %c0_9 = arith.constant 0 : index
    %32 = vector.load %arg5[%c0_8, %c0_9] : memref<1x128xf32, #tpu.memory_space<vmem>>, vector<1x128xf32>
    %33 = vector.broadcast %32 : vector<1x128xf32> to vector<8x128xf32>
    %34 = arith.addf %31, %33 : vector<8x128xf32>
    %cst_10 = arith.constant 0.000000e+00 : f32
    %35 = vector.broadcast %cst_10 : f32 to vector<8x128xf32>
    %36 = arith.maximumf %34, %35 : vector<8x128xf32>
    %c0_11 = arith.constant 0 : index
    %c0_12 = arith.constant 0 : index
    %37 = vector.load %arg6[%c0_11, %c0_12] : memref<128x128xf32, #tpu.memory_space<vmem>>, vector<128x128xf32>
    %cst_13 = arith.constant dense<0.000000e+00> : vector<8x128xf32>
    %38 = tpu.matmul %36, %37, %cst_13 {dimension_numbers = #tpu.dot_dimension_numbers<[1], [0], [0], [1], [0, 0, 1, 1], [], []>} : vector<8x128xf32>, vector<128x128xf32>, vector<8x128xf32> -> vector<8x128xf32>
    %c0_14 = arith.constant 0 : index
    %c0_15 = arith.constant 0 : index
    %39 = vector.load %arg7[%c0_14, %c0_15] : memref<1x128xf32, #tpu.memory_space<vmem>>, vector<1x128xf32>
    %40 = vector.broadcast %39 : vector<1x128xf32> to vector<8x128xf32>
    %41 = arith.addf %38, %40 : vector<8x128xf32>
    %c0_16 = arith.constant 0 : index
    %c0_17 = arith.constant 0 : index
    %42 = vector.load %arg8[%c0_16, %c0_17] : memref<8x128xf32, #tpu.memory_space<vmem>>, vector<8x128xf32>
    tpu.vector_store %arg8[%c0_16, %c0_17], %41 {strides = array<i32>} : memref<8x128xf32, #tpu.memory_space<vmem>>, vector<8x128xf32>,
    return
  }
  func.func @transform_0(%arg0: i32) -> (i32, i32) {
    %c0_i32 = arith.constant 0 : i32
    %c0_i32_0 = arith.constant 0 : i32
    return %arg0, %c0_i32 : i32, i32
  }
  func.func @transform_1(%arg0: i32) -> (i32, i32) {
    %c0_i32 = arith.constant 0 : i32
    %c0_i32_0 = arith.constant 0 : i32
    %c0_i32_1 = arith.constant 0 : i32
    return %c0_i32, %c0_i32_0 : i32, i32
  }
  func.func @transform_2(%arg0: i32) -> (i32, i32) {
    %c0_i32 = arith.constant 0 : i32
    %c0_i32_0 = arith.constant 0 : i32
    %c0_i32_1 = arith.constant 0 : i32
    return %c0_i32, %c0_i32_0 : i32, i32
  }
  func.func @transform_3(%arg0: i32) -> (i32, i32) {
    %c0_i32 = arith.constant 0 : i32
    %c0_i32_0 = arith.constant 0 : i32
    %c0_i32_1 = arith.constant 0 : i32
    return %c0_i32, %c0_i32_0 : i32, i32
  }
  func.func @transform_4(%arg0: i32) -> (i32, i32) {
    %c0_i32 = arith.constant 0 : i32
    %c0_i32_0 = arith.constant 0 : i32
    %c0_i32_1 = arith.constant 0 : i32
    return %c0_i32, %c0_i32_0 : i32, i32
  }
  func.func @transform_5(%arg0: i32) -> (i32, i32) {
    %c0_i32 = arith.constant 0 : i32
    %c0_i32_0 = arith.constant 0 : i32
    %c0_i32_1 = arith.constant 0 : i32
    return %c0_i32, %c0_i32_0 : i32, i32
  }
  func.func @transform_6(%arg0: i32) -> (i32, i32) {
    %c0_i32 = arith.constant 0 : i32
    %c0_i32_0 = arith.constant 0 : i32
    %c0_i32_1 = arith.constant 0 : i32
    return %c0_i32, %c0_i32_0 : i32, i32
  }
  func.func @transform_7(%arg0: i32) -> (i32, i32) {
    %c0_i32 = arith.constant 0 : i32
    %c0_i32_0 = arith.constant 0 : i32
    return %arg0, %c0_i32 : i32, i32
  }
}

</mosaic_0001>

<llo_original>
// kernel: tpu_custom_call.1
$region0: #{tpu_custom_call.1}
  #allocation0 [shape = 'u32[]', space=smem, size = 0x4, offset = 0x4, fixed_abs, tag = 'smem constant byte address 0x4 - core index']
  #allocation1 [shape = 'u32[144,128]{1,0:T(1,128)}', space=vmem, size = 0x12000, scoped, tag = 'internal scratch']
  %s0 = inlined_call_operand.vmem [shape: f32[8,4], index: 0, kind: input, shape index: {}]
  %s1 = inlined_call_operand.vmem [shape: f32[4,128], index: 1, kind: input, shape index: {}]
  %s2 = inlined_call_operand.vmem [shape: f32[1,128], index: 2, kind: input, shape index: {}]
  %s3 = inlined_call_operand.hbm [shape: f32[128,128], index: 3, kind: input, shape index: {}]
  %s4 = inlined_call_operand.vmem [shape: f32[1,128], index: 4, kind: input, shape index: {}]
  %s5 = inlined_call_operand.hbm [shape: f32[128,128], index: 5, kind: input, shape index: {}]
  %s6 = inlined_call_operand.vmem [shape: f32[1,128], index: 6, kind: input, shape index: {}]
  %s7 = inlined_call_operand.hbm [shape: f32[8,128], index: 7, kind: output, shape index: {}]
  %s8 = sld [smem:[#allocation0]]
  $region46: #{tpu_custom_call.1} parent=0
    _
  %s10 = ssub.s32 1, %s8
  %s11 = scalar_select 0, %s10, %s8
  $region1: #{tpu_custom_call.1} parent=0
    #allocation2 [shape = 'u8[65536]{0}', space=vmem, size = 0x10000, scoped, tag = 'input window, operand 3, single buffered']
    #allocation3 [shape = 's32[1]{0}', space=sflag, size = 0x4, scoped, tag = 'scoped memory for tpu_custom_call.1']
    #allocation4 [shape = 's32[1]{0}', space=sflag, size = 0x4, scoped, tag = 'scoped memory for tpu_custom_call.1']
    #allocation5 [shape = 'u8[65536]{0}', space=vmem, size = 0x10000, scoped, tag = 'input window, operand 5, single buffered']
    #allocation6 [shape = 's32[1]{0}', space=sflag, size = 0x4, scoped, tag = 'scoped memory for tpu_custom_call.1']
    #allocation7 [shape = 'u8[4096]{0}', space=vmem, size = 0x1000, scoped, tag = 'output window, operand 0, single buffered']
    %12 = vsyncpa [#allocation3], 0
    %13 = vsyncpa [#allocation6], 0
    %14 = vsyncpa [#allocation4], 0
    // Predicated region
    $region2: #{tpu_custom_call.1} parent=1 // pred_check
      _
    $region3: #{tpu_custom_call.1} parent=1 // pred_check_branch
      %16 = sbr.rel (0) target = $region5
    $region4: #{tpu_custom_call.1} parent=1 // pred_region
      _
    $region5: #{tpu_custom_call.1} parent=1 // pred_fallthru
      _
    // Predicated region
    $region6: #{tpu_custom_call.1} parent=1 // pred_check
      _
    $region7: #{tpu_custom_call.1} parent=1 // pred_check_branch
      %18 = sbr.rel (0) target = $region9
    $region8: #{tpu_custom_call.1} parent=1 // pred_region
      _
    $region9: #{tpu_custom_call.1} parent=1 // pred_fallthru
      _
    // Predicated region
    $region10: #{tpu_custom_call.1} parent=1 // pred_check
      _
    $region11: #{tpu_custom_call.1} parent=1 // pred_check_branch
      %20 = sbr.rel (0) target = $region13
    $region12: #{tpu_custom_call.1} parent=1 // pred_region
      _
    $region13: #{tpu_custom_call.1} parent=1 // pred_fallthru
      _
    // Predicated region
    $region14: #{tpu_custom_call.1} parent=1 // pred_check
      _
    $region15: #{tpu_custom_call.1} parent=1 // pred_check_branch
      %22 = sbr.rel (0) target = $region17
    $region16: #{tpu_custom_call.1} parent=1 // pred_region
      %s24 = ssub.s32 2048, 2048
      %25 = vsyncadd [#allocation3], %s24
      %s26 = sshll.u32 [#allocation2], 4
      %s27 = int_to_ptr.vmem [resolvable:$true] %s26
      %32 = dma.hbm_to_vmem [thread:$0]  %s3, 2048, %s27, [#allocation3], 128, 128, 8
    $region17: #{tpu_custom_call.1} parent=1 // pred_fallthru
      _
    // Predicated region
    $region18: #{tpu_custom_call.1} parent=1 // pred_check
      _
    $region19: #{tpu_custom_call.1} parent=1 // pred_check_branch
      %34 = sbr.rel (0) target = $region21
    $region20: #{tpu_custom_call.1} parent=1 // pred_region
      _
    $region21: #{tpu_custom_call.1} parent=1 // pred_fallthru
      _
    // Predicated region
    $region22: #{tpu_custom_call.1} parent=1 // pred_check
      _
    $region23: #{tpu_custom_call.1} parent=1 // pred_check_branch
      %36 = sbr.rel (0) target = $region25
    $region24: #{tpu_custom_call.1} parent=1 // pred_region
      %s38 = ssub.s32 2048, 2048
      %39 = vsyncadd [#allocation6], %s38
      %s40 = sshll.u32 [#allocation5], 4
      %s41 = int_to_ptr.vmem [resolvable:$true] %s40
      %46 = dma.hbm_to_vmem [thread:$0]  %s5, 2048, %s41, [#allocation6], 128, 128, 8
    $region25: #{tpu_custom_call.1} parent=1 // pred_fallthru
      _
    // Predicated region
    $region26: #{tpu_custom_call.1} parent=1 // pred_check
      _
    $region27: #{tpu_custom_call.1} parent=1 // pred_check_branch
      %48 = sbr.rel (0) target = $region29
    $region28: #{tpu_custom_call.1} parent=1 // pred_region
      _
    $region29: #{tpu_custom_call.1} parent=1 // pred_fallthru
      _
    // Predicated region
    $region30: #{tpu_custom_call.1} parent=1 // pred_check
      _
    $region31: #{tpu_custom_call.1} parent=1 // pred_check_branch
      %50 = sbr.rel (0) target = $region33
    $region32: #{tpu_custom_call.1} parent=1 // pred_region
      %51 = dma.done [#allocation3], 2048
    $region33: #{tpu_custom_call.1} parent=1 // pred_fallthru
      _
    // Predicated region
    $region34: #{tpu_custom_call.1} parent=1 // pred_check
      _
    $region35: #{tpu_custom_call.1} parent=1 // pred_check_branch
      %53 = sbr.rel (0) target = $region37
    $region36: #{tpu_custom_call.1} parent=1 // pred_region
      %54 = dma.done [#allocation6], 2048
    $region37: #{tpu_custom_call.1} parent=1 // pred_fallthru
      _
    %v55 = vld [vmem:[%s0] sm:$0xff]
    %v56 = vld [vmem:[%s1] sm:$0xf]
    %58 = vset.pattern.permute.xlu0 0
    %59 = vperm.xlu0 %58, %v55
    %v60 = vpop.permute.xlu0 %59
    %v62 = vlaneseq
    %v63 = vshrl.u32 %v62, 7
    %v64 = vsub.s32 0, %v63
    %v65 = vrot.slane %v56, %v64
    %v66 = vmul.f32 %v60, %v65
    %67 = vset.pattern.permute.xlu0 1
    %68 = vperm.xlu0 %67, %v55
    %v69 = vpop.permute.xlu0 %68
    %v71 = vlaneseq
    %v72 = vshrl.u32 %v71, 7
    %v73 = vsub.s32 1, %v72
    %v74 = vrot.slane %v56, %v73
    %v75 = vmul.f32 %v69, %v74
    %v76 = vadd.f32 %v66, %v75
    %77 = vset.pattern.permute.xlu0 2
    %78 = vperm.xlu0 %77, %v55
    %v79 = vpop.permute.xlu0 %78
    %v81 = vlaneseq
    %v82 = vshrl.u32 %v81, 7
    %v83 = vsub.s32 2, %v82
    %v84 = vrot.slane %v56, %v83
    %v85 = vmul.f32 %v79, %v84
    %v86 = vadd.f32 %v76, %v85
    %87 = vset.pattern.permute.xlu0 3
    %88 = vperm.xlu0 %87, %v55
    %v89 = vpop.permute.xlu0 %88
    %v91 = vlaneseq
    %v92 = vshrl.u32 %v91, 7
    %v93 = vsub.s32 3, %v92
    %v94 = vrot.slane %v56, %v93
    %v95 = vmul.f32 %v89, %v94
    %v96 = vadd.f32 %v86, %v95
    %v97 = vld [vmem:[%s2] sm:$0x1]
    %v99 = vlaneseq
    %v100 = vshrl.u32 %v99, 7
    %v101 = vsub.s32 0, %v100
    %v102 = vrot.slane %v97, %v101
    %v104 = vadd.f32 %v96, %v102
    %v105 = vmax.f32 %v104, 0.0
    %v106 = vld [vmem:[#allocation2] sm:$0xff]
    %v107 = vld [vmem:[#allocation2 + $0x8] sm:$0xff]
    %v108 = vld [vmem:[#allocation2 + $0x10] sm:$0xff]
    %v109 = vld [vmem:[#allocation2 + $0x18] sm:$0xff]
    %v110 = vld [vmem:[#allocation2 + $0x20] sm:$0xff]
    %v111 = vld [vmem:[#allocation2 + $0x28] sm:$0xff]
    %v112 = vld [vmem:[#allocation2 + $0x30] sm:$0xff]
    %v113 = vld [vmem:[#allocation2 + $0x38] sm:$0xff]
    %v114 = vld [vmem:[#allocation2 + $0x40] sm:$0xff]
    %v115 = vld [vmem:[#allocation2 + $0x48] sm:$0xff]
    %v116 = vld [vmem:[#allocation2 + $0x50] sm:$0xff]
    %v117 = vld [vmem:[#allocation2 + $0x58] sm:$0xff]
    %v118 = vld [vmem:[#allocation2 + $0x60] sm:$0xff]
    %v119 = vld [vmem:[#allocation2 + $0x68] sm:$0xff]
    %v120 = vld [vmem:[#allocation2 + $0x70] sm:$0xff]
    %v121 = vld [vmem:[#allocation2 + $0x78] sm:$0xff]
    %v122 = vld [vmem:[%s4] sm:$0x1]
    %v124 = vlaneseq
    %v125 = vshrl.u32 %v124, 7
    %v126 = vsub.s32 0, %v125
    %v127 = vrot.slane %v122, %v126
    %129 = vmatprep.subr.mxu0 0.0
    %130 = vmatpush1.msra.mxu0 %v106
    %131 = vmatprep.subr.mxu0 0.0
    %132 = vmatpush1.msra.mxu0 %v107
    %133 = vmatprep.subr.mxu0 0.0
    %134 = vmatpush1.msra.mxu0 %v108
    %135 = vmatprep.subr.mxu0 0.0
    %136 = vmatpush1.msra.mxu0 %v109
    %137 = vmatprep.subr.mxu0 0.0
    %138 = vmatpush1.msra.mxu0 %v110
    %139 = vmatprep.subr.mxu0 0.0
    %140 = vmatpush1.msra.mxu0 %v111
    %141 = vmatprep.subr.mxu0 0.0
    %142 = vmatpush1.msra.mxu0 %v112
    %143 = vmatprep.subr.mxu0 0.0
    %144 = vmatpush1.msra.mxu0 %v113
    %145 = vmatprep.subr.mxu0 0.0
    %146 = vmatpush1.msra.mxu0 %v114
    %147 = vmatprep.subr.mxu0 0.0
    %148 = vmatpush1.msra.mxu0 %v115
    %149 = vmatprep.subr.mxu0 0.0
    %150 = vmatpush1.msra.mxu0 %v116
    %151 = vmatprep.subr.mxu0 0.0
    %152 = vmatpush1.msra.mxu0 %v117
    %153 = vmatprep.subr.mxu0 0.0
    %154 = vmatpush1.msra.mxu0 %v118
    %155 = vmatprep.subr.mxu0 0.0
    %156 = vmatpush1.msra.mxu0 %v119
    %157 = vmatprep.subr.mxu0 0.0
    %158 = vmatpush1.msra.mxu0 %v120
    %159 = vmatprep.subr.mxu0 0.0
    %160 = vmatpush1.msra.mxu0 %v121
    %161 = vmatprep.subr.mxu0 0.0
    %162 = vmatpush1.msra.mxu0 0.0
    %163 = vmatprep.subr.mxu0 0.0
    %164 = vmatpush1.msra.mxu0 0.0
    %165 = vmatprep.subr.mxu0 0.0
    %166 = vmatpush1.msra.mxu0 0.0
    %167 = vmatprep.subr.mxu0 0.0
    %168 = vmatpush1.msra.mxu0 0.0
    %169 = vmatprep.subr.mxu0 0.0
    %170 = vmatpush1.msra.mxu0 0.0
    %171 = vmatprep.subr.mxu0 0.0
    %172 = vmatpush1.msra.mxu0 0.0
    %173 = vmatprep.subr.mxu0 0.0
    %174 = vmatpush1.msra.mxu0 0.0
    %175 = vmatprep.subr.mxu0 0.0
    %176 = vmatpush1.msra.mxu0 0.0
    %177 = vmatprep.subr.mxu0 0.0
    %178 = vmatpush1.msra.mxu0 0.0
    %179 = vmatprep.subr.mxu0 0.0
    %180 = vmatpush1.msra.mxu0 0.0
    %181 = vmatprep.subr.mxu0 0.0
    %182 = vmatpush1.msra.mxu0 0.0
    %183 = vmatprep.subr.mxu0 0.0
    %184 = vmatpush1.msra.mxu0 0.0
    %185 = vmatprep.subr.mxu0 0.0
    %186 = vmatpush1.msra.mxu0 0.0
    %187 = vmatprep.subr.mxu0 0.0
    %188 = vmatpush1.msra.mxu0 0.0
    %189 = vmatprep.subr.mxu0 0.0
    %190 = vmatpush1.msra.mxu0 0.0
    %191 = vmatprep.subr.mxu0 0.0
    %192 = vmatpush1.msra.mxu0 0.0
    %193 = vmatprep.mubr.f32.mxu0 0.0
    %194 = vmatmul.mubr.f32.gmra.mrb[0].mxu0 %v105
    %v195 = vpop.f32.mrb[0].mxu0
    %v196 = vadd.f32 %v127, %v195
    %v197 = vpop.f32.mrb[0].mxu0
    %198 = vdwg.mxu0
    %v199 = vmax.f32 %v196, 0.0
    %v200 = vld [vmem:[#allocation5] sm:$0xff]
    %v201 = vld [vmem:[#allocation5 + $0x8] sm:$0xff]
    %v202 = vld [vmem:[#allocation5 + $0x10] sm:$0xff]
    %v203 = vld [vmem:[#allocation5 + $0x18] sm:$0xff]
    %v204 = vld [vmem:[#allocation5 + $0x20] sm:$0xff]
    %v205 = vld [vmem:[#allocation5 + $0x28] sm:$0xff]
    %v206 = vld [vmem:[#allocation5 + $0x30] sm:$0xff]
    %v207 = vld [vmem:[#allocation5 + $0x38] sm:$0xff]
    %v208 = vld [vmem:[#allocation5 + $0x40] sm:$0xff]
    %v209 = vld [vmem:[#allocation5 + $0x48] sm:$0xff]
    %v210 = vld [vmem:[#allocation5 + $0x50] sm:$0xff]
    %v211 = vld [vmem:[#allocation5 + $0x58] sm:$0xff]
    %v212 = vld [vmem:[#allocation5 + $0x60] sm:$0xff]
    %v213 = vld [vmem:[#allocation5 + $0x68] sm:$0xff]
    %v214 = vld [vmem:[#allocation5 + $0x70] sm:$0xff]
    %v215 = vld [vmem:[#allocation5 + $0x78] sm:$0xff]
    %v216 = vld [vmem:[%s6] sm:$0x1]
    %v218 = vlaneseq
    %v219 = vshrl.u32 %v218, 7
    %v220 = vsub.s32 0, %v219
    %v221 = vrot.slane %v216, %v220
    %223 = vmatprep.subr.mxu0 0.0
    %224 = vmatpush1.msra.mxu0 %v200
    %225 = vmatprep.subr.mxu0 0.0
    %226 = vmatpush1.msra.mxu0 %v201
    %227 = vmatprep.subr.mxu0 0.0
    %228 = vmatpush1.msra.mxu0 %v202
    %229 = vmatprep.subr.mxu0 0.0
    %230 = vmatpush1.msra.mxu0 %v203
    %231 = vmatprep.subr.mxu0 0.0
    %232 = vmatpush1.msra.mxu0 %v204
    %233 = vmatprep.subr.mxu0 0.0
    %234 = vmatpush1.msra.mxu0 %v205
    %235 = vmatprep.subr.mxu0 0.0
    %236 = vmatpush1.msra.mxu0 %v206
    %237 = vmatprep.subr.mxu0 0.0
    %238 = vmatpush1.msra.mxu0 %v207
    %239 = vmatprep.subr.mxu0 0.0
    %240 = vmatpush1.msra.mxu0 %v208
    %241 = vmatprep.subr.mxu0 0.0
    %242 = vmatpush1.msra.mxu0 %v209
    %243 = vmatprep.subr.mxu0 0.0
    %244 = vmatpush1.msra.mxu0 %v210
    %245 = vmatprep.subr.mxu0 0.0
    %246 = vmatpush1.msra.mxu0 %v211
    %247 = vmatprep.subr.mxu0 0.0
    %248 = vmatpush1.msra.mxu0 %v212
    %249 = vmatprep.subr.mxu0 0.0
    %250 = vmatpush1.msra.mxu0 %v213
    %251 = vmatprep.subr.mxu0 0.0
    %252 = vmatpush1.msra.mxu0 %v214
    %253 = vmatprep.subr.mxu0 0.0
    %254 = vmatpush1.msra.mxu0 %v215
    %255 = vmatprep.subr.mxu0 0.0
    %256 = vmatpush1.msra.mxu0 0.0
    %257 = vmatprep.subr.mxu0 0.0
    %258 = vmatpush1.msra.mxu0 0.0
    %259 = vmatprep.subr.mxu0 0.0
    %260 = vmatpush1.msra.mxu0 0.0
    %261 = vmatprep.subr.mxu0 0.0
    %262 = vmatpush1.msra.mxu0 0.0
    %263 = vmatprep.subr.mxu0 0.0
    %264 = vmatpush1.msra.mxu0 0.0
    %265 = vmatprep.subr.mxu0 0.0
    %266 = vmatpush1.msra.mxu0 0.0
    %267 = vmatprep.subr.mxu0 0.0
    %268 = vmatpush1.msra.mxu0 0.0
    %269 = vmatprep.subr.mxu0 0.0
    %270 = vmatpush1.msra.mxu0 0.0
    %271 = vmatprep.subr.mxu0 0.0
    %272 = vmatpush1.msra.mxu0 0.0
    %273 = vmatprep.subr.mxu0 0.0
    %274 = vmatpush1.msra.mxu0 0.0
    %275 = vmatprep.subr.mxu0 0.0
    %276 = vmatpush1.msra.mxu0 0.0
    %277 = vmatprep.subr.mxu0 0.0
    %278 = vmatpush1.msra.mxu0 0.0
    %279 = vmatprep.subr.mxu0 0.0
    %280 = vmatpush1.msra.mxu0 0.0
    %281 = vmatprep.subr.mxu0 0.0
    %282 = vmatpush1.msra.mxu0 0.0
    %283 = vmatprep.subr.mxu0 0.0
    %284 = vmatpush1.msra.mxu0 0.0
    %285 = vmatprep.subr.mxu0 0.0
    %286 = vmatpush1.msra.mxu0 0.0
    %287 = vmatprep.mubr.f32.mxu0 0.0
    %288 = vmatmul.mubr.f32.gmra.mrb[0].mxu0 %v199
    %v289 = vpop.f32.mrb[0].mxu0
    %v290 = vadd.f32 %v221, %v289
    %v291 = vpop.f32.mrb[0].mxu0
    %292 = vdwg.mxu0
    %293 = vst [vmem:[#allocation7] sm:$0xff] %v290
    // Predicated region
    $region38: #{tpu_custom_call.1} parent=1 // pred_check
      _
    $region39: #{tpu_custom_call.1} parent=1 // pred_check_branch
      %295 = sbr.rel (0) target = $region41
    $region40: #{tpu_custom_call.1} parent=1 // pred_region
      %s297 = ssub.s32 128, 128
      %298 = vsyncadd [#allocation4], %s297
      %s300 = sshll.u32 [#allocation7], 4
      %s301 = int_to_ptr.vmem [resolvable:$true] %s300
      %303 = dma.vmem_to_hbm [thread:$0]  %s301, 128, %s7, [#allocation4]
    $region41: #{tpu_custom_call.1} parent=1 // pred_fallthru
      _
    // Predicated region
    $region42: #{tpu_custom_call.1} parent=1 // pred_check
      _
    $region43: #{tpu_custom_call.1} parent=1 // pred_check_branch
      %305 = sbr.rel (0) target = $region45
    $region44: #{tpu_custom_call.1} parent=1 // pred_region
      %306 = dma.done [#allocation4], 128
    $region45: #{tpu_custom_call.1} parent=1 // pred_fallthru
      _
    %307 = vsyncpa [#allocation3], 1
    %308 = vsyncpa [#allocation6], 1
    %309 = vsyncpa [#allocation4], 1

// kernel: tpu_custom_call.1
$region0: #{tpu_custom_call.1}
  #allocation0 [shape = 'u32[]', space=smem, size = 0x4, offset = 0x4, fixed_abs, tag = 'smem constant byte address 0x4 - core index']
  #allocation1 [shape = 'u32[144,128]{1,0:T(1,128)}', space=vmem, size = 0x12000, scoped, tag = 'internal scratch']
  %s0 = inlined_call_operand.vmem [shape: f32[8,4], index: 0, kind: input, shape index: {}]
  %s1 = inlined_call_operand.vmem [shape: f32[4,128], index: 1, kind: input, shape index: {}]
  %s2 = inlined_call_operand.vmem [shape: f32[1,128], index: 2, kind: input, shape index: {}]
  %s3 = inlined_call_operand.hbm [shape: f32[128,128], index: 3, kind: input, shape index: {}]
  %s4 = inlined_call_operand.vmem [shape: f32[1,128], index: 4, kind: input, shape index: {}]
  %s5 = inlined_call_operand.hbm [shape: f32[128,128], index: 5, kind: input, shape index: {}]
  %s6 = inlined_call_operand.vmem [shape: f32[1,128], index: 6, kind: input, shape index: {}]
  %s7 = inlined_call_operand.hbm [shape: f32[8,128], index: 7, kind: output, shape index: {}]
  %s8 = sld [smem:[#allocation0]]
  $region46: #{tpu_custom_call.1} parent=0
    _
  %s10 = ssub.s32 1, %s8
  %s11 = scalar_select 0, %s10, %s8
  $region1: #{tpu_custom_call.1} parent=0
    #allocation2 [shape = 'u8[65536]{0}', space=vmem, size = 0x10000, scoped, tag = 'input window, operand 3, single buffered']
    #allocation3 [shape = 's32[1]{0}', space=sflag, size = 0x4, scoped, tag = 'scoped memory for tpu_custom_call.1']
    #allocation4 [shape = 's32[1]{0}', space=sflag, size = 0x4, scoped, tag = 'scoped memory for tpu_custom_call.1']
    #allocation5 [shape = 'u8[65536]{0}', space=vmem, size = 0x10000, scoped, tag = 'input window, operand 5, single buffered']
    #allocation6 [shape = 's32[1]{0}', space=sflag, size = 0x4, scoped, tag = 'scoped memory for tpu_custom_call.1']
    #allocation7 [shape = 'u8[4096]{0}', space=vmem, size = 0x1000, scoped, tag = 'output window, operand 0, single buffered']
    %12 = vsyncpa [#allocation3], 0
    %13 = vsyncpa [#allocation6], 0
    %14 = vsyncpa [#allocation4], 0
    // Predicated region
    $region2: #{tpu_custom_call.1} parent=1 // pred_check
      _
    $region3: #{tpu_custom_call.1} parent=1 // pred_check_branch
      %16 = sbr.rel (0) target = $region5
    $region4: #{tpu_custom_call.1} parent=1 // pred_region
      _
    $region5: #{tpu_custom_call.1} parent=1 // pred_fallthru
      _
    // Predicated region
    $region6: #{tpu_custom_call.1} parent=1 // pred_check
      _
    $region7: #{tpu_custom_call.1} parent=1 // pred_check_branch
      %18 = sbr.rel (0) target = $region9
    $region8: #{tpu_custom_call.1} parent=1 // pred_region
      _
    $region9: #{tpu_custom_call.1} parent=1 // pred_fallthru
      _
    // Predicated region
    $region10: #{tpu_custom_call.1} parent=1 // pred_check
      _
    $region11: #{tpu_custom_call.1} parent=1 // pred_check_branch
      %20 = sbr.rel (0) target = $region13
    $region12: #{tpu_custom_call.1} parent=1 // pred_region
      _
    $region13: #{tpu_custom_call.1} parent=1 // pred_fallthru
      _
    // Predicated region
    $region14: #{tpu_custom_call.1} parent=1 // pred_check
      _
    $region15: #{tpu_custom_call.1} parent=1 // pred_check_branch
      %22 = sbr.rel (0) target = $region17
    $region16: #{tpu_custom_call.1} parent=1 // pred_region
      %s24 = ssub.s32 2048, 2048
      %25 = vsyncadd [#allocation3], %s24
      %s26 = sshll.u32 [#allocation2], 4
      %s27 = int_to_ptr.vmem [resolvable:$true] %s26
      %32 = dma.hbm_to_vmem [thread:$0]  %s3, 2048, %s27, [#allocation3], 128, 128, 8
    $region17: #{tpu_custom_call.1} parent=1 // pred_fallthru
      _
    // Predicated region
    $region18: #{tpu_custom_call.1} parent=1 // pred_check
      _
    $region19: #{tpu_custom_call.1} parent=1 // pred_check_branch
      %34 = sbr.rel (0) target = $region21
    $region20: #{tpu_custom_call.1} parent=1 // pred_region
      _
    $region21: #{tpu_custom_call.1} parent=1 // pred_fallthru
      _
    // Predicated region
    $region22: #{tpu_custom_call.1} parent=1 // pred_check
      _
    $region23: #{tpu_custom_call.1} parent=1 // pred_check_branch
      %36 = sbr.rel (0) target = $region25
    $region24: #{tpu_custom_call.1} parent=1 // pred_region
      %s38 = ssub.s32 2048, 2048
      %39 = vsyncadd [#allocation6], %s38
      %s40 = sshll.u32 [#allocation5], 4
      %s41 = int_to_ptr.vmem [resolvable:$true] %s40
      %46 = dma.hbm_to_vmem [thread:$0]  %s5, 2048, %s41, [#allocation6], 128, 128, 8
    $region25: #{tpu_custom_call.1} parent=1 // pred_fallthru
      _
    // Predicated region
    $region26: #{tpu_custom_call.1} parent=1 // pred_check
      _
    $region27: #{tpu_custom_call.1} parent=1 // pred_check_branch
      %48 = sbr.rel (0) target = $region29
    $region28: #{tpu_custom_call.1} parent=1 // pred_region
      _
    $region29: #{tpu_custom_call.1} parent=1 // pred_fallthru
      _
    // Predicated region
    $region30: #{tpu_custom_call.1} parent=1 // pred_check
      _
    $region31: #{tpu_custom_call.1} parent=1 // pred_check_branch
      %50 = sbr.rel (0) target = $region33
    $region32: #{tpu_custom_call.1} parent=1 // pred_region
      %51 = dma.done [#allocation3], 2048
    $region33: #{tpu_custom_call.1} parent=1 // pred_fallthru
      _
    // Predicated region
    $region34: #{tpu_custom_call.1} parent=1 // pred_check
      _
    $region35: #{tpu_custom_call.1} parent=1 // pred_check_branch
      %53 = sbr.rel (0) target = $region37
    $region36: #{tpu_custom_call.1} parent=1 // pred_region
      %54 = dma.done [#allocation6], 2048
    $region37: #{tpu_custom_call.1} parent=1 // pred_fallthru
      _
    %v55 = vld [vmem:[%s0] sm:$0xff]
    %v56 = vld [vmem:[%s1] sm:$0xf]
    %58 = vset.pattern.permute.xlu0 0
    %59 = vperm.xlu0 %58, %v55
    %v60 = vpop.permute.xlu0 %59
    %v62 = vlaneseq
    %v63 = vshrl.u32 %v62, 7
    %v64 = vsub.s32 0, %v63
    %v65 = vrot.slane %v56, %v64
    %v66 = vmul.f32 %v60, %v65
    %67 = vset.pattern.permute.xlu0 1
    %68 = vperm.xlu0 %67, %v55
    %v69 = vpop.permute.xlu0 %68
    %v71 = vlaneseq
    %v72 = vshrl.u32 %v71, 7
    %v73 = vsub.s32 1, %v72
    %v74 = vrot.slane %v56, %v73
    %v75 = vmul.f32 %v69, %v74
    %v76 = vadd.f32 %v66, %v75
    %77 = vset.pattern.permute.xlu0 2
    %78 = vperm.xlu0 %77, %v55
    %v79 = vpop.permute.xlu0 %78
    %v81 = vlaneseq
    %v82 = vshrl.u32 %v81, 7
    %v83 = vsub.s32 2, %v82
    %v84 = vrot.slane %v56, %v83
    %v85 = vmul.f32 %v79, %v84
    %v86 = vadd.f32 %v76, %v85
    %87 = vset.pattern.permute.xlu0 3
    %88 = vperm.xlu0 %87, %v55
    %v89 = vpop.permute.xlu0 %88
    %v91 = vlaneseq
    %v92 = vshrl.u32 %v91, 7
    %v93 = vsub.s32 3, %v92
    %v94 = vrot.slane %v56, %v93
    %v95 = vmul.f32 %v89, %v94
    %v96 = vadd.f32 %v86, %v95
    %v97 = vld [vmem:[%s2] sm:$0x1]
    %v99 = vlaneseq
    %v100 = vshrl.u32 %v99, 7
    %v101 = vsub.s32 0, %v100
    %v102 = vrot.slane %v97, %v101
    %v104 = vadd.f32 %v96, %v102
    %v105 = vmax.f32 %v104, 0.0
    %v106 = vld [vmem:[#allocation2] sm:$0xff]
    %v107 = vld [vmem:[#allocation2 + $0x8] sm:$0xff]
    %v108 = vld [vmem:[#allocation2 + $0x10] sm:$0xff]
    %v109 = vld [vmem:[#allocation2 + $0x18] sm:$0xff]
    %v110 = vld [vmem:[#allocation2 + $0x20] sm:$0xff]
    %v111 = vld [vmem:[#allocation2 + $0x28] sm:$0xff]
    %v112 = vld [vmem:[#allocation2 + $0x30] sm:$0xff]
    %v113 = vld [vmem:[#allocation2 + $0x38] sm:$0xff]
    %v114 = vld [vmem:[#allocation2 + $0x40] sm:$0xff]
    %v115 = vld [vmem:[#allocation2 + $0x48] sm:$0xff]
    %v116 = vld [vmem:[#allocation2 + $0x50] sm:$0xff]
    %v117 = vld [vmem:[#allocation2 + $0x58] sm:$0xff]
    %v118 = vld [vmem:[#allocation2 + $0x60] sm:$0xff]
    %v119 = vld [vmem:[#allocation2 + $0x68] sm:$0xff]
    %v120 = vld [vmem:[#allocation2 + $0x70] sm:$0xff]
    %v121 = vld [vmem:[#allocation2 + $0x78] sm:$0xff]
    %v122 = vld [vmem:[%s4] sm:$0x1]
    %v124 = vlaneseq
    %v125 = vshrl.u32 %v124, 7
    %v126 = vsub.s32 0, %v125
    %v127 = vrot.slane %v122, %v126
    %129 = vmatprep.subr.mxu0 0.0
    %130 = vmatpush1.msra.mxu0 %v106
    %131 = vmatprep.subr.mxu0 0.0
    %132 = vmatpush1.msra.mxu0 %v107
    %133 = vmatprep.subr.mxu0 0.0
    %134 = vmatpush1.msra.mxu0 %v108
    %135 = vmatprep.subr.mxu0 0.0
    %136 = vmatpush1.msra.mxu0 %v109
    %137 = vmatprep.subr.mxu0 0.0
    %138 = vmatpush1.msra.mxu0 %v110
    %139 = vmatprep.subr.mxu0 0.0
    %140 = vmatpush1.msra.mxu0 %v111
    %141 = vmatprep.subr.mxu0 0.0
    %142 = vmatpush1.msra.mxu0 %v112
    %143 = vmatprep.subr.mxu0 0.0
    %144 = vmatpush1.msra.mxu0 %v113
    %145 = vmatprep.subr.mxu0 0.0
    %146 = vmatpush1.msra.mxu0 %v114
    %147 = vmatprep.subr.mxu0 0.0
    %148 = vmatpush1.msra.mxu0 %v115
    %149 = vmatprep.subr.mxu0 0.0
    %150 = vmatpush1.msra.mxu0 %v116
    %151 = vmatprep.subr.mxu0 0.0
    %152 = vmatpush1.msra.mxu0 %v117
    %153 = vmatprep.subr.mxu0 0.0
    %154 = vmatpush1.msra.mxu0 %v118
    %155 = vmatprep.subr.mxu0 0.0
    %156 = vmatpush1.msra.mxu0 %v119
    %157 = vmatprep.subr.mxu0 0.0
    %158 = vmatpush1.msra.mxu0 %v120
    %159 = vmatprep.subr.mxu0 0.0
    %160 = vmatpush1.msra.mxu0 %v121
    %161 = vmatprep.subr.mxu0 0.0
    %162 = vmatpush1.msra.mxu0 0.0
    %163 = vmatprep.subr.mxu0 0.0
    %164 = vmatpush1.msra.mxu0 0.0
    %165 = vmatprep.subr.mxu0 0.0
    %166 = vmatpush1.msra.mxu0 0.0
    %167 = vmatprep.subr.mxu0 0.0
    %168 = vmatpush1.msra.mxu0 0.0
    %169 = vmatprep.subr.mxu0 0.0
    %170 = vmatpush1.msra.mxu0 0.0
    %171 = vmatprep.subr.mxu0 0.0
    %172 = vmatpush1.msra.mxu0 0.0
    %173 = vmatprep.subr.mxu0 0.0
    %174 = vmatpush1.msra.mxu0 0.0
    %175 = vmatprep.subr.mxu0 0.0
    %176 = vmatpush1.msra.mxu0 0.0
    %177 = vmatprep.subr.mxu0 0.0
    %178 = vmatpush1.msra.mxu0 0.0
    %179 = vmatprep.subr.mxu0 0.0
    %180 = vmatpush1.msra.mxu0 0.0
    %181 = vmatprep.subr.mxu0 0.0
    %182 = vmatpush1.msra.mxu0 0.0
    %183 = vmatprep.subr.mxu0 0.0
    %184 = vmatpush1.msra.mxu0 0.0
    %185 = vmatprep.subr.mxu0 0.0
    %186 = vmatpush1.msra.mxu0 0.0
    %187 = vmatprep.subr.mxu0 0.0
    %188 = vmatpush1.msra.mxu0 0.0
    %189 = vmatprep.subr.mxu0 0.0
    %190 = vmatpush1.msra.mxu0 0.0
    %191 = vmatprep.subr.mxu0 0.0
    %192 = vmatpush1.msra.mxu0 0.0
    %193 = vmatprep.mubr.f32.mxu0 0.0
    %194 = vmatmul.mubr.f32.gmra.mrb[0].mxu0 %v105
    %v195 = vpop.f32.mrb[0].mxu0
    %v196 = vadd.f32 %v127, %v195
    %v197 = vpop.f32.mrb[0].mxu0
    %198 = vdwg.mxu0
    %v199 = vmax.f32 %v196, 0.0
    %v200 = vld [vmem:[#allocation5] sm:$0xff]
    %v201 = vld [vmem:[#allocation5 + $0x8] sm:$0xff]
    %v202 = vld [vmem:[#allocation5 + $0x10] sm:$0xff]
    %v203 = vld [vmem:[#allocation5 + $0x18] sm:$0xff]
    %v204 = vld [vmem:[#allocation5 + $0x20] sm:$0xff]
    %v205 = vld [vmem:[#allocation5 + $0x28] sm:$0xff]
    %v206 = vld [vmem:[#allocation5 + $0x30] sm:$0xff]
    %v207 = vld [vmem:[#allocation5 + $0x38] sm:$0xff]
    %v208 = vld [vmem:[#allocation5 + $0x40] sm:$0xff]
    %v209 = vld [vmem:[#allocation5 + $0x48] sm:$0xff]
    %v210 = vld [vmem:[#allocation5 + $0x50] sm:$0xff]
    %v211 = vld [vmem:[#allocation5 + $0x58] sm:$0xff]
    %v212 = vld [vmem:[#allocation5 + $0x60] sm:$0xff]
    %v213 = vld [vmem:[#allocation5 + $0x68] sm:$0xff]
    %v214 = vld [vmem:[#allocation5 + $0x70] sm:$0xff]
    %v215 = vld [vmem:[#allocation5 + $0x78] sm:$0xff]
    %v216 = vld [vmem:[%s6] sm:$0x1]
    %v218 = vlaneseq
    %v219 = vshrl.u32 %v218, 7
    %v220 = vsub.s32 0, %v219
    %v221 = vrot.slane %v216, %v220
    %223 = vmatprep.subr.mxu0 0.0
    %224 = vmatpush1.msra.mxu0 %v200
    %225 = vmatprep.subr.mxu0 0.0
    %226 = vmatpush1.msra.mxu0 %v201
    %227 = vmatprep.subr.mxu0 0.0
    %228 = vmatpush1.msra.mxu0 %v202
    %229 = vmatprep.subr.mxu0 0.0
    %230 = vmatpush1.msra.mxu0 %v203
    %231 = vmatprep.subr.mxu0 0.0
    %232 = vmatpush1.msra.mxu0 %v204
    %233 = vmatprep.subr.mxu0 0.0
    %234 = vmatpush1.msra.mxu0 %v205
    %235 = vmatprep.subr.mxu0 0.0
    %236 = vmatpush1.msra.mxu0 %v206
    %237 = vmatprep.subr.mxu0 0.0
    %238 = vmatpush1.msra.mxu0 %v207
    %239 = vmatprep.subr.mxu0 0.0
    %240 = vmatpush1.msra.mxu0 %v208
    %241 = vmatprep.subr.mxu0 0.0
    %242 = vmatpush1.msra.mxu0 %v209
    %243 = vmatprep.subr.mxu0 0.0
    %244 = vmatpush1.msra.mxu0 %v210
    %245 = vmatprep.subr.mxu0 0.0
    %246 = vmatpush1.msra.mxu0 %v211
    %247 = vmatprep.subr.mxu0 0.0
    %248 = vmatpush1.msra.mxu0 %v212
    %249 = vmatprep.subr.mxu0 0.0
    %250 = vmatpush1.msra.mxu0 %v213
    %251 = vmatprep.subr.mxu0 0.0
    %252 = vmatpush1.msra.mxu0 %v214
    %253 = vmatprep.subr.mxu0 0.0
    %254 = vmatpush1.msra.mxu0 %v215
    %255 = vmatprep.subr.mxu0 0.0
    %256 = vmatpush1.msra.mxu0 0.0
    %257 = vmatprep.subr.mxu0 0.0
    %258 = vmatpush1.msra.mxu0 0.0
    %259 = vmatprep.subr.mxu0 0.0
    %260 = vmatpush1.msra.mxu0 0.0
    %261 = vmatprep.subr.mxu0 0.0
    %262 = vmatpush1.msra.mxu0 0.0
    %263 = vmatprep.subr.mxu0 0.0
    %264 = vmatpush1.msra.mxu0 0.0
    %265 = vmatprep.subr.mxu0 0.0
    %266 = vmatpush1.msra.mxu0 0.0
    %267 = vmatprep.subr.mxu0 0.0
    %268 = vmatpush1.msra.mxu0 0.0
    %269 = vmatprep.subr.mxu0 0.0
    %270 = vmatpush1.msra.mxu0 0.0
    %271 = vmatprep.subr.mxu0 0.0
    %272 = vmatpush1.msra.mxu0 0.0
    %273 = vmatprep.subr.mxu0 0.0
    %274 = vmatpush1.msra.mxu0 0.0
    %275 = vmatprep.subr.mxu0 0.0
    %276 = vmatpush1.msra.mxu0 0.0
    %277 = vmatprep.subr.mxu0 0.0
    %278 = vmatpush1.msra.mxu0 0.0
    %279 = vmatprep.subr.mxu0 0.0
    %280 = vmatpush1.msra.mxu0 0.0
    %281 = vmatprep.subr.mxu0 0.0
    %282 = vmatpush1.msra.mxu0 0.0
    %283 = vmatprep.subr.mxu0 0.0
    %284 = vmatpush1.msra.mxu0 0.0
    %285 = vmatprep.subr.mxu0 0.0
    %286 = vmatpush1.msra.mxu0 0.0
    %287 = vmatprep.mubr.f32.mxu0 0.0
    %288 = vmatmul.mubr.f32.gmra.mrb[0].mxu0 %v199
    %v289 = vpop.f32.mrb[0].mxu0
    %v290 = vadd.f32 %v221, %v289
    %v291 = vpop.f32.mrb[0].mxu0
    %292 = vdwg.mxu0
    %293 = vst [vmem:[#allocation7] sm:$0xff] %v290
    // Predicated region
    $region38: #{tpu_custom_call.1} parent=1 // pred_check
      _
    $region39: #{tpu_custom_call.1} parent=1 // pred_check_branch
      %295 = sbr.rel (0) target = $region41
    $region40: #{tpu_custom_call.1} parent=1 // pred_region
      %s297 = ssub.s32 128, 128
      %298 = vsyncadd [#allocation4], %s297
      %s300 = sshll.u32 [#allocation7], 4
      %s301 = int_to_ptr.vmem [resolvable:$true] %s300
      %303 = dma.vmem_to_hbm [thread:$0]  %s301, 128, %s7, [#allocation4]
    $region41: #{tpu_custom_call.1} parent=1 // pred_fallthru
      _
    // Predicated region
    $region42: #{tpu_custom_call.1} parent=1 // pred_check
      _
    $region43: #{tpu_custom_call.1} parent=1 // pred_check_branch
      %305 = sbr.rel (0) target = $region45
    $region44: #{tpu_custom_call.1} parent=1 // pred_region
      %306 = dma.done [#allocation4], 128
    $region45: #{tpu_custom_call.1} parent=1 // pred_fallthru
      _
    %307 = vsyncpa [#allocation3], 1
    %308 = vsyncpa [#allocation6], 1
    %309 = vsyncpa [#allocation4], 1

</llo_original>
